<compile_context>
chip_gen: v5e
topology: v5e:2x2
jax: 0.10.0
libtpu: 0.0.40
codegen_flags: <defaults>
</compile_context>

<pallas_src>
import functools

import jax
import jax.numpy as jnp
from jax.experimental import pallas as pl
from jax.experimental.pallas import tpu as pltpu

_LANE = 128      # vreg lane width; hidden feature dims are padded to this
_SUBLANE = 8     # f32 sublane height; batch tiles are padded to this
_MAX_TB = 512    # max batch-tile rows (amortizes ~0.35us/grid-step overhead)


def _round_up(n, m):
    return ((n + m - 1) // m) * m


def _fused_mlp_kernel(*refs, num_layers, use_bf16):
    """refs = (x_ref, w0, b0, w1, b1, ..., w_{L-1}, b_{L-1}, o_ref).

    ReLU after every layer except the last.  One grid step processes one batch
    tile through the entire layer stack; the activation never leaves VMEM.
    """
    x_ref = refs[0]
    o_ref = refs[-1]
    params = refs[1:-1]

    x = x_ref[...]                          # (TB, IN) f32
    for l in range(num_layers):             # static unroll, depth is small
        w = params[2 * l][...]              # bf16 (default) or f32
        b = params[2 * l + 1][...]          # (1, OUT_l) f32
        if use_bf16:
            # Weights were pre-cast to bf16 once in prepare_params; only the
            # activation cast happens here.  f32 accumulate on the MXU.
            y = jnp.dot(x.astype(jnp.bfloat16), w,
                        preferred_element_type=jnp.float32)
        else:
            # Note: f32 matmul on the MXU is multi-pass emulation; close to
            # but not bit-identical with CPU/GPU f32 FMA.
            y = jnp.dot(x, w, preferred_element_type=jnp.float32)
        y = y + b                           # f32 bias add (broadcast over batch)
        if l < num_layers - 1:
            y = jnp.maximum(y, 0.0)         # ReLU on hidden layers only
        x = y
    o_ref[...] = x.astype(o_ref.dtype)


def init_params(key, input_size, output_size, config):
    """Deterministic parameter init mirroring the PyTorch module's shapes."""
    hidden = config["HIDDEN_LAYER_WIDTH"]
    depth = config["MODEL_DEPTH"]
    dims = [input_size] + [hidden] * depth
    params = []
    for i in range(depth):
        key, kw, kb = jax.random.split(key, 3)
        bound = 1.0 / jnp.sqrt(dims[i])
        w = jax.random.uniform(kw, (dims[i], dims[i + 1]), jnp.float32, -bound, bound)
        b = jax.random.uniform(kb, (dims[i + 1],), jnp.float32, -bound, bound)
        params.append((w, b))
    key, kw, kb = jax.random.split(key, 3)
    bound = 1.0 / jnp.sqrt(hidden)
    w_out = jax.random.uniform(kw, (hidden, output_size), jnp.float32, -bound, bound)
    b_out = jax.random.uniform(kb, (output_size,), jnp.float32, -bound, bound)
    return params, (w_out, b_out)


def prepare_params(hidden_params, out_params, use_bf16=True):
    """Pad hidden feature dims to 128-lane multiples and pre-cast weights.

    The first layer's input dim and the last layer's output dim are left
    unpadded (full-dim blocks are legal and avoid wrapper pad/slice + HBM
    read/write amplification).  Biases stay f32.  Done ONCE, outside the
    per-call path.
    """
    w_dtype = jnp.bfloat16 if use_bf16 else jnp.float32
    layers = list(hidden_params) + [out_params]
    n = len(layers)
    padded = []
    for idx, (w, b) in enumerate(layers):
        in_f, out_f = w.shape
        in_p = in_f if idx == 0 else _round_up(in_f, _LANE)
        out_p = out_f if idx == n - 1 else _round_up(out_f, _LANE)
        w_p = (jnp.zeros((in_p, out_p), jnp.float32)
               .at[:in_f, :out_f].set(w).astype(w_dtype))
        b_p = jnp.zeros((1, out_p), jnp.float32).at[0, :out_f].set(b)
        padded.append((w_p, b_p))
    return padded


def _pick_batch_tiling(batch):
    """Return (padded_batch, batch_tile)."""
    if batch <= 2 * _LANE:
        # Small batch: a single sublane-padded tile, one grid step.
        b_pad = _round_up(batch, _SUBLANE)
        return b_pad, b_pad
    # Large batch: big tiles (<= 512 rows) to amortize per-step overhead, but
    # capped so the "parallel" axis has >= 2 steps and can shard across v7x's
    # two TensorCores (v5e/v6e have one TC; bigger tiles are simply better).
    b_pad = _round_up(batch, _LANE)
    tb = max(_LANE, min(_MAX_TB, (b_pad // (2 * _LANE)) * _LANE))
    b_pad = _round_up(b_pad, tb)
    return b_pad, tb


@jax.jit
def nn_forward(x, padded_params):
    """Fused forward pass: one pallas_call for the whole MLP."""
    batch, in_f = x.shape
    num_layers = len(padded_params)
    out_f = padded_params[-1][0].shape[1]          # unpadded output width
    use_bf16 = padded_params[0][0].dtype == jnp.bfloat16

    b_pad, tb = _pick_batch_tiling(batch)
    x_p = x if b_pad == batch else jnp.pad(x, ((0, b_pad - batch), (0, 0)))

    in_specs = [pl.BlockSpec((tb, in_f), lambda i: (i, 0))]
    flat_params = []
    for w_p, b_p in padded_params:
        # Whole-array, constant-index blocks: fetched once, VMEM-resident,
        # reused by every batch tile.
        # TODO(synk): if HIDDEN_LAYER_WIDTH grows past 128, (a) set
        # pipeline_mode=pl.Buffered(1) on these constant-index specs and
        # re-derive vmem_limit_bytes for v7x's 64 MiB VMEM, (b) pad hidden
        # dims to 256 for the v6e/v7x 256x256 MXU, and (c) if a layer no
        # longer fits VMEM, switch to (tm,tk)/(tk,tn) tiling with an
        # "arbitrary" K axis + f32 accumulator scratch.
        in_specs.append(pl.BlockSpec(w_p.shape, lambda i: (0, 0)))
        in_specs.append(pl.BlockSpec(b_p.shape, lambda i: (0, 0)))
        flat_params.append(w_p)
        flat_params.append(b_p)

    out = pl.pallas_call(
        functools.partial(_fused_mlp_kernel, num_layers=num_layers,
                          use_bf16=use_bf16),
        out_shape=jax.ShapeDtypeStruct((b_pad, out_f), jnp.float32),
        grid=(b_pad // tb,),
        in_specs=in_specs,
        out_specs=pl.BlockSpec((tb, out_f), lambda i: (i, 0)),
        compiler_params=pltpu.CompilerParams(
            dimension_semantics=("parallel",),
            vmem_limit_bytes=32 * 1024 * 1024,   # safe on v5e/v6e/v7x
        ),
    )(x_p, *flat_params)

    return out if b_pad == batch else out[:batch]


if __name__ == "__main__":
    config = {"HIDDEN_LAYER_WIDTH": 32, "MODEL_DEPTH": 3}
    input_size, output_size = 16, 4
    batch = 8

    key = jax.random.PRNGKey(0)
    key, kx = jax.random.split(key)
    x = jax.random.normal(kx, (batch, input_size), jnp.float32)

    hidden_params, out_params = init_params(key, input_size, output_size, config)

    # Pure-JAX f32 reference.
    ref = x
    for w, b in hidden_params:
        ref = jnp.maximum(ref @ w + b, 0.0)
    ref = ref @ out_params[0] + out_params[1]

    # Default path: bf16 weights on the MXU, f32 accumulate/bias/ReLU.
    params_bf16 = prepare_params(hidden_params, out_params, use_bf16=True)
    out_bf16 = jax.block_until_ready(nn_forward(x, params_bf16))

    # f32 path for a tight-tolerance correctness check.
    params_f32 = prepare_params(hidden_params, out_params, use_bf16=False)
    out_f32 = jax.block_until_ready(nn_forward(x, params_f32))

    assert out_bf16.shape == (batch, output_size)
    assert out_f32.shape == (batch, output_size)
    assert jnp.allclose(out_f32, ref, atol=1e-5, rtol=1e-5)
    # bf16 matmuls change numerics (~1e-2 relative on deep stacks) -> looser tol.
    assert jnp.allclose(out_bf16, ref, atol=2e-2, rtol=2e-2)

    print("KERNEL_OK")
</pallas_src>

<mosaic_0001>
module attributes {stable_mosaic.version = 11 : i64} {
  func.func @_fused_mlp_kernel(%arg0: i32, %arg1: memref<8x16xf32, #tpu.memory_space<vmem>>, %arg2: memref<16x128xbf16, #tpu.memory_space<vmem>>, %arg3: memref<1x128xf32, #tpu.memory_space<vmem>>, %arg4: memref<128x128xbf16, #tpu.memory_space<vmem>>, %arg5: memref<1x128xf32, #tpu.memory_space<vmem>>, %arg6: memref<128x128xbf16, #tpu.memory_space<vmem>>, %arg7: memref<1x128xf32, #tpu.memory_space<vmem>>, %arg8: memref<128x4xbf16, #tpu.memory_space<vmem>>, %arg9: memref<1x4xf32, #tpu.memory_space<vmem>>, %arg10: memref<8x4xf32, #tpu.memory_space<vmem>>) attributes {dimension_semantics = [#tpu.dimension_semantics<parallel>], iteration_bounds = array<i64: 1>, scalar_prefetch = 0 : i64, scratch_operands = 0 : i64, tpu.core_type = #tpu.core_type<tc>, window_params = [{transform_indices = @transform_0, window_bounds = array<i64: 8, 16>}, {pipeline_mode = #tpu.pipeline_mode<synchronous>, transform_indices = @transform_1, window_bounds = array<i64: 16, 128>}, {pipeline_mode = #tpu.pipeline_mode<synchronous>, transform_indices = @transform_2, window_bounds = array<i64: 1, 128>}, {pipeline_mode = #tpu.pipeline_mode<synchronous>, transform_indices = @transform_3, window_bounds = array<i64: 128, 128>}, {pipeline_mode = #tpu.pipeline_mode<synchronous>, transform_indices = @transform_4, window_bounds = array<i64: 1, 128>}, {pipeline_mode = #tpu.pipeline_mode<synchronous>, transform_indices = @transform_5, window_bounds = array<i64: 128, 128>}, {pipeline_mode = #tpu.pipeline_mode<synchronous>, transform_indices = @transform_6, window_bounds = array<i64: 1, 128>}, {pipeline_mode = #tpu.pipeline_mode<synchronous>, transform_indices = @transform_7, window_bounds = array<i64: 128, 4>}, {pipeline_mode = #tpu.pipeline_mode<synchronous>, transform_indices = @transform_8, window_bounds = array<i64: 1, 4>}, {transform_indices = @transform_9, window_bounds = array<i64: 8, 4>}]} {
    %c0 = arith.constant 0 : index
    %c0_0 = arith.constant 0 : index
    %0 = vector.load %arg1[%c0, %c0_0] : memref<8x16xf32, #tpu.memory_space<vmem>>, vector<8x16xf32>
    %c0_1 = arith.constant 0 : index
    %c0_2 = arith.constant 0 : index
    %1 = vector.load %arg2[%c0_1, %c0_2] : memref<16x128xbf16, #tpu.memory_space<vmem>>, vector<16x128xbf16>
    %c0_3 = arith.constant 0 : index
    %c0_4 = arith.constant 0 : index
    %2 = vector.load %arg3[%c0_3, %c0_4] : memref<1x128xf32, #tpu.memory_space<vmem>>, vector<1x128xf32>
    %3 = arith.truncf %0 : vector<8x16xf32> to vector<8x16xbf16>
    %cst = arith.constant dense<0.000000e+00> : vector<8x128xf32>
    %4 = tpu.matmul %3, %1, %cst {dimension_numbers = #tpu.dot_dimension_numbers<[1], [0], [0], [1], [0, 0, 1, 1], [], []>} : vector<8x16xbf16>, vector<16x128xbf16>, vector<8x128xf32> -> vector<8x128xf32>
    %5 = vector.broadcast %2 : vector<1x128xf32> to vector<8x128xf32>
    %6 = arith.addf %4, %5 : vector<8x128xf32>
    %cst_5 = arith.constant 0.000000e+00 : f32
    %7 = vector.broadcast %cst_5 : f32 to vector<8x128xf32>
    %8 = arith.maximumf %6, %7 : vector<8x128xf32>
    %c0_6 = arith.constant 0 : index
    %c0_7 = arith.constant 0 : index
    %9 = vector.load %arg4[%c0_6, %c0_7] : memref<128x128xbf16, #tpu.memory_space<vmem>>, vector<128x128xbf16>
    %c0_8 = arith.constant 0 : index
    %c0_9 = arith.constant 0 : index
    %10 = vector.load %arg5[%c0_8, %c0_9] : memref<1x128xf32, #tpu.memory_space<vmem>>, vector<1x128xf32>
    %11 = arith.truncf %8 : vector<8x128xf32> to vector<8x128xbf16>
    %cst_10 = arith.constant dense<0.000000e+00> : vector<8x128xf32>
    %12 = tpu.matmul %11, %9, %cst_10 {dimension_numbers = #tpu.dot_dimension_numbers<[1], [0], [0], [1], [0, 0, 1, 1], [], []>} : vector<8x128xbf16>, vector<128x128xbf16>, vector<8x128xf32> -> vector<8x128xf32>
    %13 = vector.broadcast %10 : vector<1x128xf32> to vector<8x128xf32>
    %14 = arith.addf %12, %13 : vector<8x128xf32>
    %cst_11 = arith.constant 0.000000e+00 : f32
    %15 = vector.broadcast %cst_11 : f32 to vector<8x128xf32>
    %16 = arith.maximumf %14, %15 : vector<8x128xf32>
    %c0_12 = arith.constant 0 : index
    %c0_13 = arith.constant 0 : index
    %17 = vector.load %arg6[%c0_12, %c0_13] : memref<128x128xbf16, #tpu.memory_space<vmem>>, vector<128x128xbf16>
    %c0_14 = arith.constant 0 : index
    %c0_15 = arith.constant 0 : index
    %18 = vector.load %arg7[%c0_14, %c0_15] : memref<1x128xf32, #tpu.memory_space<vmem>>, vector<1x128xf32>
    %19 = arith.truncf %16 : vector<8x128xf32> to vector<8x128xbf16>
    %cst_16 = arith.constant dense<0.000000e+00> : vector<8x128xf32>
    %20 = tpu.matmul %19, %17, %cst_16 {dimension_numbers = #tpu.dot_dimension_numbers<[1], [0], [0], [1], [0, 0, 1, 1], [], []>} : vector<8x128xbf16>, vector<128x128xbf16>, vector<8x128xf32> -> vector<8x128xf32>
    %21 = vector.broadcast %18 : vector<1x128xf32> to vector<8x128xf32>
    %22 = arith.addf %20, %21 : vector<8x128xf32>
    %cst_17 = arith.constant 0.000000e+00 : f32
    %23 = vector.broadcast %cst_17 : f32 to vector<8x128xf32>
    %24 = arith.maximumf %22, %23 : vector<8x128xf32>
    %c0_18 = arith.constant 0 : index
    %c0_19 = arith.constant 0 : index
    %25 = vector.load %arg8[%c0_18, %c0_19] : memref<128x4xbf16, #tpu.memory_space<vmem>>, vector<128x4xbf16>
    %c0_20 = arith.constant 0 : index
    %c0_21 = arith.constant 0 : index
    %26 = vector.load %arg9[%c0_20, %c0_21] : memref<1x4xf32, #tpu.memory_space<vmem>>, vector<1x4xf32>
    %27 = arith.truncf %24 : vector<8x128xf32> to vector<8x128xbf16>
    %cst_22 = arith.constant dense<0.000000e+00> : vector<8x4xf32>
    %28 = tpu.matmul %27, %25, %cst_22 {dimension_numbers = #tpu.dot_dimension_numbers<[1], [0], [0], [1], [0, 0, 1, 1], [], []>} : vector<8x128xbf16>, vector<128x4xbf16>, vector<8x4xf32> -> vector<8x4xf32>
    %29 = vector.broadcast %26 : vector<1x4xf32> to vector<8x4xf32>
    %30 = arith.addf %28, %29 : vector<8x4xf32>
    %c0_23 = arith.constant 0 : index
    %c0_24 = arith.constant 0 : index
    %31 = vector.load %arg10[%c0_23, %c0_24] : memref<8x4xf32, #tpu.memory_space<vmem>>, vector<8x4xf32>
    tpu.vector_store %arg10[%c0_23, %c0_24], %30 {strides = array<i32>} : memref<8x4xf32, #tpu.memory_space<vmem>>, vector<8x4xf32>,
    return
  }
  func.func @transform_0(%arg0: i32) -> (i32, i32) {
    %c0_i32 = arith.constant 0 : i32
    %c0_i32_0 = arith.constant 0 : i32
    return %arg0, %c0_i32 : i32, i32
  }
  func.func @transform_1(%arg0: i32) -> (i32, i32) {
    %c0_i32 = arith.constant 0 : i32
    %c0_i32_0 = arith.constant 0 : i32
    %c0_i32_1 = arith.constant 0 : i32
    return %c0_i32, %c0_i32_0 : i32, i32
  }
  func.func @transform_2(%arg0: i32) -> (i32, i32) {
    %c0_i32 = arith.constant 0 : i32
    %c0_i32_0 = arith.constant 0 : i32
    %c0_i32_1 = arith.constant 0 : i32
    return %c0_i32, %c0_i32_0 : i32, i32
  }
  func.func @transform_3(%arg0: i32) -> (i32, i32) {
    %c0_i32 = arith.constant 0 : i32
    %c0_i32_0 = arith.constant 0 : i32
    %c0_i32_1 = arith.constant 0 : i32
    return %c0_i32, %c0_i32_0 : i32, i32
  }
  func.func @transform_4(%arg0: i32) -> (i32, i32) {
    %c0_i32 = arith.constant 0 : i32
    %c0_i32_0 = arith.constant 0 : i32
    %c0_i32_1 = arith.constant 0 : i32
    return %c0_i32, %c0_i32_0 : i32, i32
  }
  func.func @transform_5(%arg0: i32) -> (i32, i32) {
    %c0_i32 = arith.constant 0 : i32
    %c0_i32_0 = arith.constant 0 : i32
    %c0_i32_1 = arith.constant 0 : i32
    return %c0_i32, %c0_i32_0 : i32, i32
  }
  func.func @transform_6(%arg0: i32) -> (i32, i32) {
    %c0_i32 = arith.constant 0 : i32
    %c0_i32_0 = arith.constant 0 : i32
    %c0_i32_1 = arith.constant 0 : i32
    return %c0_i32, %c0_i32_0 : i32, i32
  }
  func.func @transform_7(%arg0: i32) -> (i32, i32) {
    %c0_i32 = arith.constant 0 : i32
    %c0_i32_0 = arith.constant 0 : i32
    %c0_i32_1 = arith.constant 0 : i32
    return %c0_i32, %c0_i32_0 : i32, i32
  }
  func.func @transform_8(%arg0: i32) -> (i32, i32) {
    %c0_i32 = arith.constant 0 : i32
    %c0_i32_0 = arith.constant 0 : i32
    %c0_i32_1 = arith.constant 0 : i32
    return %c0_i32, %c0_i32_0 : i32, i32
  }
  func.func @transform_9(%arg0: i32) -> (i32, i32) {
    %c0_i32 = arith.constant 0 : i32
    %c0_i32_0 = arith.constant 0 : i32
    return %arg0, %c0_i32 : i32, i32
  }
}

</mosaic_0001>

<llo_original>
// kernel: nn_forward.1
$region0: #{nn_forward.1}
  #allocation0 [shape = 'u32[]', space=smem, size = 0x4, offset = 0x4, fixed_abs, tag = 'smem constant byte address 0x4 - core index']
  #allocation1 [shape = 'u32[72,128]{1,0:T(1,128)}', space=vmem, size = 0x9000, scoped, tag = 'internal scratch']
  %s0 = inlined_call_operand.hbm [shape: f32[8,16], index: 0, kind: input, shape index: {}]
  %s1 = inlined_call_operand.hbm [shape: bf16[16,128], index: 1, kind: input, shape index: {}]
  %s2 = inlined_call_operand.vmem [shape: f32[1,128], index: 2, kind: input, shape index: {}]
  %s3 = inlined_call_operand.vmem [shape: bf16[128,128], index: 3, kind: input, shape index: {}]
  %s4 = inlined_call_operand.vmem [shape: f32[1,128], index: 4, kind: input, shape index: {}]
  %s5 = inlined_call_operand.hbm [shape: bf16[128,128], index: 5, kind: input, shape index: {}]
  %s6 = inlined_call_operand.vmem [shape: f32[1,128], index: 6, kind: input, shape index: {}]
  %s7 = inlined_call_operand.vmem [shape: bf16[128,4], index: 7, kind: input, shape index: {}]
  %s8 = inlined_call_operand.vmem [shape: f32[1,4], index: 8, kind: input, shape index: {}]
  %s9 = inlined_call_operand.vmem [shape: f32[8,4], index: 9, kind: output, shape index: {}]
  %s10 = sld [smem:[#allocation0]]
  $region58: #{nn_forward.1} parent=0
    _
  %s12 = ssub.s32 1, %s10
  %s13 = scalar_select 0, %s12, %s10
  $region1: #{nn_forward.1} parent=0
    #allocation2 [shape = 'u8[4096]{0}', space=vmem, size = 0x1000, scoped, tag = 'input window, operand 0, single buffered']
    #allocation3 [shape = 's32[1]{0}', space=sflag, size = 0x4, scoped, tag = 'scoped memory for nn_forward.1']
    #allocation4 [shape = 'u8[4096]{0}', space=vmem, size = 0x1000, scoped, tag = 'input window, operand 1, single buffered']
    #allocation5 [shape = 's32[1]{0}', space=sflag, size = 0x4, scoped, tag = 'scoped memory for nn_forward.1']
    #allocation6 [shape = 'u8[32768]{0}', space=vmem, size = 0x8000, scoped, tag = 'input window, operand 5, single buffered']
    %14 = vsyncpa [#allocation3], 0
    %15 = vsyncpa [#allocation5], 0
    // Predicated region
    $region2: #{nn_forward.1} parent=1 // pred_check
      _
    $region3: #{nn_forward.1} parent=1 // pred_check_branch
      %17 = sbr.rel (0) target = $region5
    $region4: #{nn_forward.1} parent=1 // pred_region
      %19 = vsyncadd [#allocation3], 0
      %s21 = sshll.u32 %s0, 4
      %s22 = int_to_ptr.hbm [resolvable:$true] %s21
      %s23 = sshll.u32 [#allocation2], 4
      %s24 = int_to_ptr.vmem [resolvable:$true] %s23
      %26 = dma.hbm_to_vmem [thread:$0]  %s22, 128, %s24, [#allocation3]
    $region5: #{nn_forward.1} parent=1 // pred_fallthru
      _
    // Predicated region
    $region6: #{nn_forward.1} parent=1 // pred_check
      _
    $region7: #{nn_forward.1} parent=1 // pred_check_branch
      %28 = sbr.rel (0) target = $region9
    $region8: #{nn_forward.1} parent=1 // pred_region
      %30 = vsyncadd [#allocation5], 0
      %s31 = sshll.u32 %s1, 4
      %s32 = int_to_ptr.hbm [resolvable:$true] %s31
      %s33 = sshll.u32 [#allocation4], 4
      %s34 = int_to_ptr.vmem [resolvable:$true] %s33
      %39 = dma.hbm_to_vmem [thread:$0]  %s32, 128, %s34, [#allocation5], 64, 64, 4
    $region9: #{nn_forward.1} parent=1 // pred_fallthru
      _
    // Predicated region
    $region10: #{nn_forward.1} parent=1 // pred_check
      _
    $region11: #{nn_forward.1} parent=1 // pred_check_branch
      %41 = sbr.rel (0) target = $region13
    $region12: #{nn_forward.1} parent=1 // pred_region
      _
    $region13: #{nn_forward.1} parent=1 // pred_fallthru
      _
    // Predicated region
    $region14: #{nn_forward.1} parent=1 // pred_check
      _
    $region15: #{nn_forward.1} parent=1 // pred_check_branch
      %43 = sbr.rel (0) target = $region17
    $region16: #{nn_forward.1} parent=1 // pred_region
      _
    $region17: #{nn_forward.1} parent=1 // pred_fallthru
      _
    // Predicated region
    $region18: #{nn_forward.1} parent=1 // pred_check
      _
    $region19: #{nn_forward.1} parent=1 // pred_check_branch
      %45 = sbr.rel (0) target = $region21
    $region20: #{nn_forward.1} parent=1 // pred_region
      _
    $region21: #{nn_forward.1} parent=1 // pred_fallthru
      _
    // Predicated region
    $region22: #{nn_forward.1} parent=1 // pred_check
      _
    $region23: #{nn_forward.1} parent=1 // pred_check_branch
      %47 = sbr.rel (0) target = $region25
    $region24: #{nn_forward.1} parent=1 // pred_region
      %49 = vsyncadd [#allocation5], 0
      %s50 = sshll.u32 %s5, 4
      %s51 = int_to_ptr.hbm [resolvable:$true] %s50
      %s52 = sshll.u32 [#allocation6], 4
      %s53 = int_to_ptr.vmem [resolvable:$true] %s52
      %58 = dma.hbm_to_vmem [thread:$0]  %s51, 1024, %s53, [#allocation5], 64, 64, 4
    $region25: #{nn_forward.1} parent=1 // pred_fallthru
      _
    // Predicated region
    $region26: #{nn_forward.1} parent=1 // pred_check
      _
    $region27: #{nn_forward.1} parent=1 // pred_check_branch
      %60 = sbr.rel (0) target = $region29
    $region28: #{nn_forward.1} parent=1 // pred_region
      _
    $region29: #{nn_forward.1} parent=1 // pred_fallthru
      _
    // Predicated region
    $region30: #{nn_forward.1} parent=1 // pred_check
      _
    $region31: #{nn_forward.1} parent=1 // pred_check_branch
      %62 = sbr.rel (0) target = $region33
    $region32: #{nn_forward.1} parent=1 // pred_region
      _
    $region33: #{nn_forward.1} parent=1 // pred_fallthru
      _
    // Predicated region
    $region34: #{nn_forward.1} parent=1 // pred_check
      _
    $region35: #{nn_forward.1} parent=1 // pred_check_branch
      %64 = sbr.rel (0) target = $region37
    $region36: #{nn_forward.1} parent=1 // pred_region
      _
    $region37: #{nn_forward.1} parent=1 // pred_fallthru
      _
    // Predicated region
    $region38: #{nn_forward.1} parent=1 // pred_check
      _
    $region39: #{nn_forward.1} parent=1 // pred_check_branch
      %66 = sbr.rel (0) target = $region41
    $region40: #{nn_forward.1} parent=1 // pred_region
      %68 = dma.done [#allocation3], 128
    $region41: #{nn_forward.1} parent=1 // pred_fallthru
      _
    // Predicated region
    $region42: #{nn_forward.1} parent=1 // pred_check
      _
    $region43: #{nn_forward.1} parent=1 // pred_check_branch
      %70 = sbr.rel (0) target = $region45
    $region44: #{nn_forward.1} parent=1 // pred_region
      %72 = dma.done [#allocation5], 128
    $region45: #{nn_forward.1} parent=1 // pred_fallthru
      _
    // Predicated region
    $region46: #{nn_forward.1} parent=1 // pred_check
      _
    $region47: #{nn_forward.1} parent=1 // pred_check_branch
      %74 = sbr.rel (0) target = $region49
    $region48: #{nn_forward.1} parent=1 // pred_region
      %76 = dma.done [#allocation5], 1024
    $region49: #{nn_forward.1} parent=1 // pred_fallthru
      _
    %v78 = vld [vmem:[#allocation2] sm:$0xff]
    %v79 = vld [vmem:[#allocation4] sm:$0xf]
    %v80 = vld [vmem:[#allocation4 + $0x4] sm:$0xf]
    %v81 = vld [vmem:[%s2] sm:$0x1]
    %v82 = vpack.c.bf16 %v78, %v78
    %v84 = vperm.slane %v81, 0
    %v88 = vunpack.c.l.b16 %v79
    %v89 = vunpack.c.l.b16 %v80
    %v90 = vpack.c.b16 %v89, %v88
    %vm92 = vcmask 130048
    %v94 = vsel %vm92, %v82, 0
    %96 = vmatpush.bf16.msra.mxu0 0
    %97 = vmatpush.bf16.msra.mxu0 0
    %98 = vmatpush.bf16.msra.mxu0 0
    %99 = vmatpush.bf16.msra.mxu0 0
    %100 = vmatpush.bf16.msra.mxu0 0
    %101 = vmatpush.bf16.msra.mxu0 0
    %102 = vmatpush.bf16.msra.mxu0 0
    %103 = vmatpush.bf16.msra.mxu0 %v90
    %104 = vmatmul.bf16.gmra.mxu0 %v94
    %v105 = vpop.f32.mrf.mxu0
    %v106 = vadd.f32 %v84, %v105
    %v107 = vpop.f32.mrf.mxu0
    %108 = vdwg.mxu0
    %v109 = vmax.f32 %v106, 0.0
    %v110 = vld [vmem:[%s3] sm:$0xf]
    %v111 = vld [vmem:[%s3 + $0x4] sm:$0xf]
    %v112 = vld [vmem:[%s3 + $0x8] sm:$0xf]
    %v113 = vld [vmem:[%s3 + $0xc] sm:$0xf]
    %v114 = vld [vmem:[%s3 + $0x10] sm:$0xf]
    %v115 = vld [vmem:[%s3 + $0x14] sm:$0xf]
    %v116 = vld [vmem:[%s3 + $0x18] sm:$0xf]
    %v117 = vld [vmem:[%s3 + $0x1c] sm:$0xf]
    %v118 = vld [vmem:[%s3 + $0x20] sm:$0xf]
    %v119 = vld [vmem:[%s3 + $0x24] sm:$0xf]
    %v120 = vld [vmem:[%s3 + $0x28] sm:$0xf]
    %v121 = vld [vmem:[%s3 + $0x2c] sm:$0xf]
    %v122 = vld [vmem:[%s3 + $0x30] sm:$0xf]
    %v123 = vld [vmem:[%s3 + $0x34] sm:$0xf]
    %v124 = vld [vmem:[%s3 + $0x38] sm:$0xf]
    %v125 = vld [vmem:[%s3 + $0x3c] sm:$0xf]
    %v126 = vld [vmem:[%s4] sm:$0x1]
    %v127 = vpack.c.bf16 %v109, %v109
    %v129 = vperm.slane %v126, 0
    %v147 = vunpack.c.l.b16 %v110
    %v148 = vunpack.c.l.b16 %v111
    %v149 = vunpack.c.l.b16 %v112
    %v150 = vunpack.c.l.b16 %v113
    %v151 = vunpack.c.l.b16 %v114
    %v152 = vunpack.c.l.b16 %v115
    %v153 = vunpack.c.l.b16 %v116
    %v154 = vunpack.c.l.b16 %v117
    %v155 = vunpack.c.l.b16 %v118
    %v156 = vunpack.c.l.b16 %v119
    %v157 = vunpack.c.l.b16 %v120
    %v158 = vunpack.c.l.b16 %v121
    %v159 = vunpack.c.l.b16 %v122
    %v160 = vunpack.c.l.b16 %v123
    %v161 = vunpack.c.l.b16 %v124
    %v162 = vunpack.c.l.b16 %v125
    %v163 = vpack.c.b16 %v148, %v147
    %v164 = vpack.c.b16 %v150, %v149
    %v165 = vpack.c.b16 %v152, %v151
    %v166 = vpack.c.b16 %v154, %v153
    %v167 = vpack.c.b16 %v156, %v155
    %v168 = vpack.c.b16 %v158, %v157
    %v169 = vpack.c.b16 %v160, %v159
    %v170 = vpack.c.b16 %v162, %v161
    %179 = vmatpush.bf16.msra.mxu0 %v170
    %180 = vmatpush.bf16.msra.mxu0 %v169
    %181 = vmatpush.bf16.msra.mxu0 %v168
    %182 = vmatpush.bf16.msra.mxu0 %v167
    %183 = vmatpush.bf16.msra.mxu0 %v166
    %184 = vmatpush.bf16.msra.mxu0 %v165
    %185 = vmatpush.bf16.msra.mxu0 %v164
    %186 = vmatpush.bf16.msra.mxu0 %v163
    %187 = vmatmul.bf16.gmra.mxu0 %v127
    %v188 = vpop.f32.mrf.mxu0
    %v189 = vadd.f32 %v129, %v188
    %v190 = vpop.f32.mrf.mxu0
    %191 = vdwg.mxu0
    %v192 = vmax.f32 %v189, 0.0
    %v193 = vld [vmem:[#allocation6] sm:$0xf]
    %v194 = vld [vmem:[#allocation6 + $0x4] sm:$0xf]
    %v195 = vld [vmem:[#allocation6 + $0x8] sm:$0xf]
    %v196 = vld [vmem:[#allocation6 + $0xc] sm:$0xf]
    %v197 = vld [vmem:[#allocation6 + $0x10] sm:$0xf]
    %v198 = vld [vmem:[#allocation6 + $0x14] sm:$0xf]
    %v199 = vld [vmem:[#allocation6 + $0x18] sm:$0xf]
    %v200 = vld [vmem:[#allocation6 + $0x1c] sm:$0xf]
    %v201 = vld [vmem:[#allocation6 + $0x20] sm:$0xf]
    %v202 = vld [vmem:[#allocation6 + $0x24] sm:$0xf]
    %v203 = vld [vmem:[#allocation6 + $0x28] sm:$0xf]
    %v204 = vld [vmem:[#allocation6 + $0x2c] sm:$0xf]
    %v205 = vld [vmem:[#allocation6 + $0x30] sm:$0xf]
    %v206 = vld [vmem:[#allocation6 + $0x34] sm:$0xf]
    %v207 = vld [vmem:[#allocation6 + $0x38] sm:$0xf]
    %v208 = vld [vmem:[#allocation6 + $0x3c] sm:$0xf]
    %v209 = vld [vmem:[%s6] sm:$0x1]
    %v210 = vpack.c.bf16 %v192, %v192
    %v212 = vperm.slane %v209, 0
    %v230 = vunpack.c.l.b16 %v193
    %v231 = vunpack.c.l.b16 %v194
    %v232 = vunpack.c.l.b16 %v195
    %v233 = vunpack.c.l.b16 %v196
    %v234 = vunpack.c.l.b16 %v197
    %v235 = vunpack.c.l.b16 %v198
    %v236 = vunpack.c.l.b16 %v199
    %v237 = vunpack.c.l.b16 %v200
    %v238 = vunpack.c.l.b16 %v201
    %v239 = vunpack.c.l.b16 %v202
    %v240 = vunpack.c.l.b16 %v203
    %v241 = vunpack.c.l.b16 %v204
    %v242 = vunpack.c.l.b16 %v205
    %v243 = vunpack.c.l.b16 %v206
    %v244 = vunpack.c.l.b16 %v207
    %v245 = vunpack.c.l.b16 %v208
    %v246 = vpack.c.b16 %v231, %v230
    %v247 = vpack.c.b16 %v233, %v232
    %v248 = vpack.c.b16 %v235, %v234
    %v249 = vpack.c.b16 %v237, %v236
    %v250 = vpack.c.b16 %v239, %v238
    %v251 = vpack.c.b16 %v241, %v240
    %v252 = vpack.c.b16 %v243, %v242
    %v253 = vpack.c.b16 %v245, %v244
    %262 = vmatpush.bf16.msra.mxu0 %v253
    %263 = vmatpush.bf16.msra.mxu0 %v252
    %264 = vmatpush.bf16.msra.mxu0 %v251
    %265 = vmatpush.bf16.msra.mxu0 %v250
    %266 = vmatpush.bf16.msra.mxu0 %v249
    %267 = vmatpush.bf16.msra.mxu0 %v248
    %268 = vmatpush.bf16.msra.mxu0 %v247
    %269 = vmatpush.bf16.msra.mxu0 %v246
    %270 = vmatmul.bf16.gmra.mxu0 %v210
    %v271 = vpop.f32.mrf.mxu0
    %v272 = vadd.f32 %v212, %v271
    %v273 = vpop.f32.mrf.mxu0
    %274 = vdwg.mxu0
    %v275 = vmax.f32 %v272, 0.0
    %v276 = vld [vmem:[%s7] sm:$0xf]
    %v277 = vld [vmem:[%s7 + $0x4] sm:$0xf]
    %v278 = vld [vmem:[%s7 + $0x8] sm:$0xf]
    %v279 = vld [vmem:[%s7 + $0xc] sm:$0xf]
    %v280 = vld [vmem:[%s7 + $0x10] sm:$0xf]
    %v281 = vld [vmem:[%s7 + $0x14] sm:$0xf]
    %v282 = vld [vmem:[%s7 + $0x18] sm:$0xf]
    %v283 = vld [vmem:[%s7 + $0x1c] sm:$0xf]
    %v284 = vld [vmem:[%s7 + $0x20] sm:$0xf]
    %v285 = vld [vmem:[%s7 + $0x24] sm:$0xf]
    %v286 = vld [vmem:[%s7 + $0x28] sm:$0xf]
    %v287 = vld [vmem:[%s7 + $0x2c] sm:$0xf]
    %v288 = vld [vmem:[%s7 + $0x30] sm:$0xf]
    %v289 = vld [vmem:[%s7 + $0x34] sm:$0xf]
    %v290 = vld [vmem:[%s7 + $0x38] sm:$0xf]
    %v291 = vld [vmem:[%s7 + $0x3c] sm:$0xf]
    %v292 = vld [vmem:[%s8] sm:$0x1]
    %v293 = vpack.c.bf16 %v275, %v275
    %v295 = vperm.slane %v292, 0
    %v313 = vunpack.c.l.b16 %v276
    %v314 = vunpack.c.l.b16 %v277
    %v315 = vunpack.c.l.b16 %v278
    %v316 = vunpack.c.l.b16 %v279
    %v317 = vunpack.c.l.b16 %v280
    %v318 = vunpack.c.l.b16 %v281
    %v319 = vunpack.c.l.b16 %v282
    %v320 = vunpack.c.l.b16 %v283
    %v321 = vunpack.c.l.b16 %v284
    %v322 = vunpack.c.l.b16 %v285
    %v323 = vunpack.c.l.b16 %v286
    %v324 = vunpack.c.l.b16 %v287
    %v325 = vunpack.c.l.b16 %v288
    %v326 = vunpack.c.l.b16 %v289
    %v327 = vunpack.c.l.b16 %v290
    %v328 = vunpack.c.l.b16 %v291
    %v329 = vpack.c.b16 %v314, %v313
    %v330 = vpack.c.b16 %v316, %v315
    %v331 = vpack.c.b16 %v318, %v317
    %v332 = vpack.c.b16 %v320, %v319
    %v333 = vpack.c.b16 %v322, %v321
    %v334 = vpack.c.b16 %v324, %v323
    %v335 = vpack.c.b16 %v326, %v325
    %v336 = vpack.c.b16 %v328, %v327
    %345 = vmatpush.bf16.msra.mxu0 %v336
    %346 = vmatpush.bf16.msra.mxu0 %v335
    %347 = vmatpush.bf16.msra.mxu0 %v334
    %348 = vmatpush.bf16.msra.mxu0 %v333
    %349 = vmatpush.bf16.msra.mxu0 %v332
    %350 = vmatpush.bf16.msra.mxu0 %v331
    %351 = vmatpush.bf16.msra.mxu0 %v330
    %352 = vmatpush.bf16.msra.mxu0 %v329
    %353 = vmatmul.bf16.gmra.mxu0 %v293
    %v354 = vpop.f32.mrf.mxu0
    %v355 = vadd.f32 %v295, %v354
    %v356 = vpop.f32.mrf.mxu0
    %357 = vdwg.mxu0
    %vm358 = vcmask 31744
    %359 = vst.msk [vmem:[%s9] sm:$0xff] %vm358, %v355
    // Predicated region
    $region50: #{nn_forward.1} parent=1 // pred_check
      _
    $region51: #{nn_forward.1} parent=1 // pred_check_branch
      %361 = sbr.rel (0) target = $region53
    $region52: #{nn_forward.1} parent=1 // pred_region
      _
    $region53: #{nn_forward.1} parent=1 // pred_fallthru
      _
    // Predicated region
    $region54: #{nn_forward.1} parent=1 // pred_check
      _
    $region55: #{nn_forward.1} parent=1 // pred_check_branch
      %363 = sbr.rel (0) target = $region57
    $region56: #{nn_forward.1} parent=1 // pred_region
      _
    $region57: #{nn_forward.1} parent=1 // pred_fallthru
      _
    %364 = vsyncpa [#allocation3], 1
    %365 = vsyncpa [#allocation5], 1

</llo_original>
